<compile_context>
chip_gen: v5e
topology: v5e:2x2
jax: 0.10.0
libtpu: 0.0.40
codegen_flags: <defaults>
</compile_context>

<pallas_src>
import jax
import jax.numpy as jnp
from jax import lax
from jax.experimental import pallas as pl
from jax.experimental.pallas import tpu as pltpu

K = 64          # Date2Vec embedding size used by T-ESBERT
K1 = K // 2     # fc1 output width
K2 = K // 2     # fc2 output width
IN_FEATS = 6    # (year, month, day, hour, minute, second)

PACK = 2                      # date rows packed per kernel row (lane-dense out)
PACKED_IN = PACK * IN_FEATS   # 12
PACKED_OUT = PACK * K         # 128 lanes -> unmasked, full-vreg output stores
MAX_TILE = 4096               # packed rows per grid step (= 8192 date rows)


def d2v_fused_kernel(x_ref, w_ref, b_ref, out_ref):
    """y = x @ W_blk + b_blk ; apply sin on lanes with (lane mod 64) >= 32."""
    y = jnp.dot(x_ref[...], w_ref[...],
                preferred_element_type=jnp.float32) + b_ref[...]
    lane = lax.broadcasted_iota(jnp.int32, y.shape, 1)
    # First 32 lanes of each 64-lane group = fc1 (linear), last 32 = sin(fc2).
    out_ref[...] = jnp.where((lane & (K - 1)) < K1, y, jnp.sin(y))


def _round_up(v, m):
    return ((v + m - 1) // m) * m


def date2vec_encode(x, w1, b1, w2, b2, *, max_tile=MAX_TILE):
    """Pallas wrapper. x: (N, 6) f32 -> (N, 64) f32.

    Note: for very small batches (a few hundred rows or fewer) a plain XLA
    `x @ W + b` would amortize better than a kernel launch; we always run the
    Pallas path here so the kernel is exercised by the demo.
    """
    n = x.shape[0]

    # ---- host-side fusion / packing (tiny tensors, done once per call) ----
    w = jnp.concatenate([w1, w2], axis=1)               # (6, 64)
    b = jnp.concatenate([b1, b2], axis=1)               # (1, 64)
    zeros = jnp.zeros_like(w)
    w_blk = jnp.concatenate(
        [jnp.concatenate([w, zeros], axis=1),
         jnp.concatenate([zeros, w], axis=1)], axis=0)  # (12, 128) block-diag
    b_blk = jnp.concatenate([b, b], axis=1)             # (1, 128)

    # Pack PACK date rows per kernel row; pad to a whole number of tiles.
    half_rows = pl.cdiv(n, PACK)
    tile = min(max_tile, max(8, _round_up(half_rows, 8)))
    half_pad = _round_up(half_rows, tile)
    n_pad = PACK * half_pad
    if n_pad != n:
        x = jnp.concatenate(
            [x, jnp.zeros((n_pad - n, IN_FEATS), x.dtype)], axis=0)
    xp = x.reshape(half_pad, PACKED_IN)                 # (half_pad, 12)

    grid = (half_pad // tile,)
    cost = pl.CostEstimate(
        flops=2 * half_pad * PACKED_IN * PACKED_OUT,
        transcendentals=half_pad * PACKED_OUT,
        bytes_accessed=4 * (xp.size + half_pad * PACKED_OUT
                            + w_blk.size + b_blk.size),
    )

    out_packed = pl.pallas_call(
        d2v_fused_kernel,
        out_shape=jax.ShapeDtypeStruct((half_pad, PACKED_OUT), jnp.float32),
        grid=grid,
        in_specs=[
            pl.BlockSpec((tile, PACKED_IN), lambda i: (i, 0)),       # x tiles
            pl.BlockSpec((PACKED_IN, PACKED_OUT), lambda i: (0, 0)),  # W (res.)
            pl.BlockSpec((1, PACKED_OUT), lambda i: (0, 0)),          # b (res.)
        ],
        out_specs=pl.BlockSpec((tile, PACKED_OUT), lambda i: (i, 0)),
        compiler_params=pltpu.CompilerParams(
            dimension_semantics=("parallel",)),
        cost_estimate=cost,
    )(xp, w_blk, b_blk)

    # Free row-major reshape back to one date row per output row; drop padding.
    return out_packed.reshape(n_pad, K)[:n]


def init_params(key):
    """Deterministic synthetic parameters matching nn.Linear(6, 32) x2."""
    k1, k2, k3, k4 = jax.random.split(key, 4)
    bound = 1.0 / jnp.sqrt(IN_FEATS)
    # Stored transposed relative to torch.nn.Linear.weight: (in, out).
    w1 = jax.random.uniform(k1, (IN_FEATS, K1), jnp.float32, -bound, bound)
    b1 = jax.random.uniform(k2, (1, K1), jnp.float32, -bound, bound)
    w2 = jax.random.uniform(k3, (IN_FEATS, K2), jnp.float32, -bound, bound)
    b2 = jax.random.uniform(k4, (1, K2), jnp.float32, -bound, bound)
    return w1, b1, w2, b2


if __name__ == "__main__":
    key = jax.random.PRNGKey(0)
    key_x, key_p = jax.random.split(key)

    batch = 8
    # Synthetic date-feature rows: [year, month, day, hour, minute, second].
    x = jax.random.uniform(key_x, (batch, IN_FEATS), jnp.float32, 0.0, 60.0)

    w1, b1, w2, b2 = init_params(key_p)

    out = date2vec_encode(x, w1, b1, w2, b2)
    out = jax.block_until_ready(out)

    # Pure-JAX reference check of the original encode() semantics.
    ref = jnp.concatenate([x @ w1 + b1, jnp.sin(x @ w2 + b2)], axis=1)
    assert out.shape == (batch, K)
    assert jnp.allclose(out, ref, atol=1e-5, rtol=1e-5)

    print("KERNEL_OK")
</pallas_src>

<mosaic_0001>
module attributes {stable_mosaic.version = 11 : i64} {
  func.func @d2v_fused_kernel(%arg0: i32, %arg1: memref<8x12xf32, #tpu.memory_space<vmem>>, %arg2: memref<12x128xf32, #tpu.memory_space<vmem>>, %arg3: memref<1x128xf32, #tpu.memory_space<vmem>>, %arg4: memref<8x128xf32, #tpu.memory_space<vmem>>) attributes {dimension_semantics = [#tpu.dimension_semantics<parallel>], iteration_bounds = array<i64: 1>, scalar_prefetch = 0 : i64, scratch_operands = 0 : i64, tpu.core_type = #tpu.core_type<tc>, window_params = [{transform_indices = @transform_0, window_bounds = array<i64: 8, 12>}, {pipeline_mode = #tpu.pipeline_mode<synchronous>, transform_indices = @transform_1, window_bounds = array<i64: 12, 128>}, {pipeline_mode = #tpu.pipeline_mode<synchronous>, transform_indices = @transform_2, window_bounds = array<i64: 1, 128>}, {transform_indices = @transform_3, window_bounds = array<i64: 8, 128>}]} {
    %c0 = arith.constant 0 : index
    %c0_0 = arith.constant 0 : index
    %0 = vector.load %arg1[%c0, %c0_0] : memref<8x12xf32, #tpu.memory_space<vmem>>, vector<8x12xf32>
    %c0_1 = arith.constant 0 : index
    %c0_2 = arith.constant 0 : index
    %1 = vector.load %arg2[%c0_1, %c0_2] : memref<12x128xf32, #tpu.memory_space<vmem>>, vector<12x128xf32>
    %cst = arith.constant dense<0.000000e+00> : vector<8x128xf32>
    %2 = tpu.matmul %0, %1, %cst {dimension_numbers = #tpu.dot_dimension_numbers<[1], [0], [0], [1], [0, 0, 1, 1], [], []>} : vector<8x12xf32>, vector<12x128xf32>, vector<8x128xf32> -> vector<8x128xf32>
    %c0_3 = arith.constant 0 : index
    %c0_4 = arith.constant 0 : index
    %3 = vector.load %arg3[%c0_3, %c0_4] : memref<1x128xf32, #tpu.memory_space<vmem>>, vector<1x128xf32>
    %4 = vector.broadcast %3 : vector<1x128xf32> to vector<8x128xf32>
    %5 = arith.addf %2, %4 : vector<8x128xf32>
    %6 = tpu.iota {dimensions = array<i32: 1>} : vector<8x128xi32>
    %c63_i32 = arith.constant 63 : i32
    %7 = vector.broadcast %c63_i32 : i32 to vector<8x128xi32>
    %8 = arith.andi %6, %7 : vector<8x128xi32>
    %c32_i32 = arith.constant 32 : i32
    %9 = vector.broadcast %c32_i32 : i32 to vector<8x128xi32>
    %10 = arith.cmpi slt, %8, %9 : vector<8x128xi32>
    %11 = math.sin %5 : vector<8x128xf32>
    %12 = arith.select %10, %5, %11 : vector<8x128xi1>, vector<8x128xf32>
    %c0_5 = arith.constant 0 : index
    %c0_6 = arith.constant 0 : index
    %13 = vector.load %arg4[%c0_5, %c0_6] : memref<8x128xf32, #tpu.memory_space<vmem>>, vector<8x128xf32>
    tpu.vector_store %arg4[%c0_5, %c0_6], %12 {strides = array<i32>} : memref<8x128xf32, #tpu.memory_space<vmem>>, vector<8x128xf32>,
    return
  }
  func.func @transform_0(%arg0: i32) -> (i32, i32) {
    %c0_i32 = arith.constant 0 : i32
    %c0_i32_0 = arith.constant 0 : i32
    return %arg0, %c0_i32 : i32, i32
  }
  func.func @transform_1(%arg0: i32) -> (i32, i32) {
    %c0_i32 = arith.constant 0 : i32
    %c0_i32_0 = arith.constant 0 : i32
    %c0_i32_1 = arith.constant 0 : i32
    return %c0_i32, %c0_i32_0 : i32, i32
  }
  func.func @transform_2(%arg0: i32) -> (i32, i32) {
    %c0_i32 = arith.constant 0 : i32
    %c0_i32_0 = arith.constant 0 : i32
    %c0_i32_1 = arith.constant 0 : i32
    return %c0_i32, %c0_i32_0 : i32, i32
  }
  func.func @transform_3(%arg0: i32) -> (i32, i32) {
    %c0_i32 = arith.constant 0 : i32
    %c0_i32_0 = arith.constant 0 : i32
    return %arg0, %c0_i32 : i32, i32
  }
}

</mosaic_0001>

<llo_original>
// kernel: tpu_custom_call.1
$region0: #{tpu_custom_call.1}
  #allocation0 [shape = 'u32[]', space=smem, size = 0x4, offset = 0x4, fixed_abs, tag = 'smem constant byte address 0x4 - core index']
  #allocation1 [shape = 'u32[72,128]{1,0:T(1,128)}', space=vmem, size = 0x9000, scoped, tag = 'internal scratch']
  %s0 = inlined_call_operand.hbm [shape: f32[8,12], index: 0, kind: input, shape index: {}]
  %s1 = inlined_call_operand.hbm [shape: f32[12,128], index: 1, kind: input, shape index: {}]
  %s2 = inlined_call_operand.vmem [shape: f32[1,128], index: 2, kind: input, shape index: {}]
  %s3 = inlined_call_operand.hbm [shape: f32[8,128], index: 3, kind: output, shape index: {}]
  %s4 = sld [smem:[#allocation0]]
  $region30: #{tpu_custom_call.1} parent=0
    _
  %s6 = ssub.s32 1, %s4
  %s7 = scalar_select 0, %s6, %s4
  $region1: #{tpu_custom_call.1} parent=0
    #allocation2 [shape = 'u8[4096]{0}', space=vmem, size = 0x1000, scoped, tag = 'input window, operand 0, single buffered']
    #allocation3 [shape = 's32[1]{0}', space=sflag, size = 0x4, scoped, tag = 'scoped memory for tpu_custom_call.1']
    #allocation4 [shape = 's32[1]{0}', space=sflag, size = 0x4, scoped, tag = 'scoped memory for tpu_custom_call.1']
    #allocation5 [shape = 'u8[8192]{0}', space=vmem, size = 0x2000, scoped, tag = 'input window, operand 1, single buffered']
    #allocation6 [shape = 's32[1]{0}', space=sflag, size = 0x4, scoped, tag = 'scoped memory for tpu_custom_call.1']
    #allocation7 [shape = 'u8[4096]{0}', space=vmem, size = 0x1000, scoped, tag = 'output window, operand 0, single buffered']
    %8 = vsyncpa [#allocation3], 0
    %9 = vsyncpa [#allocation6], 0
    %10 = vsyncpa [#allocation4], 0
    // Predicated region
    $region2: #{tpu_custom_call.1} parent=1 // pred_check
      _
    $region3: #{tpu_custom_call.1} parent=1 // pred_check_branch
      %12 = sbr.rel (0) target = $region5
    $region4: #{tpu_custom_call.1} parent=1 // pred_region
      %14 = vsyncadd [#allocation3], 0
      %s16 = sshll.u32 %s0, 4
      %s17 = int_to_ptr.hbm [resolvable:$true] %s16
      %s18 = sshll.u32 [#allocation2], 4
      %s19 = int_to_ptr.vmem [resolvable:$true] %s18
      %21 = dma.hbm_to_vmem [thread:$0]  %s17, 128, %s19, [#allocation3]
    $region5: #{tpu_custom_call.1} parent=1 // pred_fallthru
      _
    // Predicated region
    $region6: #{tpu_custom_call.1} parent=1 // pred_check
      _
    $region7: #{tpu_custom_call.1} parent=1 // pred_check_branch
      %23 = sbr.rel (0) target = $region9
    $region8: #{tpu_custom_call.1} parent=1 // pred_region
      %25 = vsyncadd [#allocation6], 0
      %s26 = sshll.u32 %s1, 4
      %s27 = int_to_ptr.hbm [resolvable:$true] %s26
      %s28 = sshll.u32 [#allocation5], 4
      %s29 = int_to_ptr.vmem [resolvable:$true] %s28
      %34 = dma.hbm_to_vmem [thread:$0]  %s27, 256, %s29, [#allocation6], 128, 128, 8
    $region9: #{tpu_custom_call.1} parent=1 // pred_fallthru
      _
    // Predicated region
    $region10: #{tpu_custom_call.1} parent=1 // pred_check
      _
    $region11: #{tpu_custom_call.1} parent=1 // pred_check_branch
      %36 = sbr.rel (0) target = $region13
    $region12: #{tpu_custom_call.1} parent=1 // pred_region
      _
    $region13: #{tpu_custom_call.1} parent=1 // pred_fallthru
      _
    // Predicated region
    $region14: #{tpu_custom_call.1} parent=1 // pred_check
      _
    $region15: #{tpu_custom_call.1} parent=1 // pred_check_branch
      %38 = sbr.rel (0) target = $region17
    $region16: #{tpu_custom_call.1} parent=1 // pred_region
      %40 = dma.done [#allocation3], 128
    $region17: #{tpu_custom_call.1} parent=1 // pred_fallthru
      _
    // Predicated region
    $region18: #{tpu_custom_call.1} parent=1 // pred_check
      _
    $region19: #{tpu_custom_call.1} parent=1 // pred_check_branch
      %42 = sbr.rel (0) target = $region21
    $region20: #{tpu_custom_call.1} parent=1 // pred_region
      %44 = dma.done [#allocation6], 256
    $region21: #{tpu_custom_call.1} parent=1 // pred_fallthru
      _
    %v45 = vld [vmem:[#allocation2] sm:$0xff]
    %v46 = vld [vmem:[#allocation5] sm:$0xff]
    %v47 = vld [vmem:[#allocation5 + $0x8] sm:$0xf]
    %v48 = vld [vmem:[%s2] sm:$0x1]
    %v50 = vperm.slane %v48, 0
    %vm52 = vcmask 97280
    %v54 = vsel %vm52, %v45, 0
    %vm56 = vcmask 1043456
    %v58 = vsel %vm56, %v47, 0
    %60 = vmatpush.msra.mxu0 0.0
    %61 = vmatpush.msra.mxu0 0.0
    %62 = vmatpush.msra.mxu0 0.0
    %63 = vmatpush.msra.mxu0 0.0
    %64 = vmatpush.msra.mxu0 0.0
    %65 = vmatpush.msra.mxu0 0.0
    %66 = vmatpush.msra.mxu0 0.0
    %67 = vmatpush.msra.mxu0 0.0
    %68 = vmatpush.msra.mxu0 0.0
    %69 = vmatpush.msra.mxu0 0.0
    %70 = vmatpush.msra.mxu0 0.0
    %71 = vmatpush.msra.mxu0 0.0
    %72 = vmatpush.msra.mxu0 0.0
    %73 = vmatpush.msra.mxu0 0.0
    %74 = vmatpush.msra.mxu0 %v58
    %75 = vmatpush.msra.mxu0 %v46
    %76 = vmatmul.f32.gmra.mxu0 %v54
    %v77 = vpop.f32.mrf.mxu0
    %v78 = vadd.f32 %v50, %v77
    %79 = vdwg.mxu0
    %v80 = vlaneseq
    %v81 = vand.u32 %v80, 127
    %v82 = vand.u32 %v81, 63
    %vm83 = vcmp.lt.s32.totalorder %v82, 32
    %v84 = vand.u32 2147483647, %v78
    %vm85 = vcmp.le.f32.partialorder %v84, 0.7853982
    %vm86 = vcmp.lt.s32.totalorder %v78, 0
    %v87 = vand.u32 %v78, 2139095040
    %v88 = vshrl.u32 %v87, 23
    %v89 = vsub.s32 %v88, 127
    %v90 = vand.u32 2147483647, %v78
    %v91 = vand.u32 %v90, 8388607
    %v92 = vor.u32 %v91, 8388608
    %v93 = vsub.s32 0, %v92
    %v94 = vadd.s32 %v89, 1
    %vm95 = vcmp.gt.s32.totalorder %v94, 0
    %v96 = vsel %vm95, %v94, 0
    %v97 = vshrl.u32 %v96, 5
    %v98 = vand.u32 %v96, 31
    %v99 = vsub.s32 32, %v98
    %v100 = vshrl.u32 683565275, %v99
    %v101 = vshll.u32 683565275, %v98
    %v102 = vshrl.u32 2475754826, %v99
    %v103 = vor.u32 %v101, %v102
    %v104 = vshll.u32 2475754826, %v98
    %v105 = vshrl.u32 2131351028, %v99
    %v106 = vor.u32 %v104, %v105
    %v107 = vshll.u32 2131351028, %v98
    %v108 = vshrl.u32 2102212464, %v99
    %v109 = vor.u32 %v107, %v108
    %v110 = vshll.u32 2102212464, %v98
    %v111 = vshrl.u32 920167782, %v99
    %v112 = vor.u32 %v110, %v111
    %v113 = vshll.u32 920167782, %v98
    %v114 = vshrl.u32 1326507024, %v99
    %v115 = vor.u32 %v113, %v114
    %vm116 = vcmp.lt.s32.totalorder %v97, 1
    %vm117 = vcmp.lt.s32.totalorder %v97, 2
    %vm118 = vcmp.lt.s32.totalorder %v97, 3
    %vm119 = vcmp.lt.s32.totalorder %v97, 4
    %v120 = vsel %vm116, %v100, %v103
    %v121 = vsel %vm119, %v109, 2102212464
    %v122 = vsel %vm118, %v106, %v121
    %v123 = vsel %vm117, %v120, %v122
    %v124 = vsel %vm116, %v103, %v106
    %v125 = vsel %vm119, %v112, 920167782
    %v126 = vsel %vm118, %v109, %v125
    %v127 = vsel %vm117, %v124, %v126
    %v128 = vsel %vm116, %v106, %v109
    %v129 = vsel %vm119, %v115, 1326507024
    %v130 = vsel %vm118, %v112, %v129
    %v131 = vsel %vm117, %v128, %v130
    %v132 = vshll.u32 %v92, 8
    %v133 = vand.u32 %v132, 65535
    %v134 = vshrl.u32 %v132, 16
    %v135 = vand.u32 %v131, 65535
    %v136 = vshrl.u32 %v131, 16
    %v137 = vmul.u32 %v133, %v135
    %v138 = vmul.u32 %v133, %v136
    %v139 = vmul.u32 %v134, %v135
    %v140 = vmul.u32 %v134, %v136
    %v141 = vshll.u32 %v138, 16
    %v142 = vshrl.u32 %v138, 16
    %v143 = vshll.u32 %v139, 16
    %v144 = vshrl.u32 %v139, 16
    %vm145 = vc.u32 %v137, %v141
    %v146 = vsel %vm145, 1, 0
    %v147 = vadd.s32 %v137, %v141
    %v148 = vadd.s32 %v140, %v146
    %vm149 = vc.u32 %v147, %v143
    %v150 = vsel %vm149, 1, 0
    %v151 = vadd.s32 %v147, %v143
    %v152 = vadd.s32 %v148, %v150
    %v153 = vadd.s32 %v152, %v142
    %v154 = vadd.s32 %v153, %v144
    %v155 = vand.u32 %v132, 65535
    %v156 = vshrl.u32 %v132, 16
    %v157 = vand.u32 %v127, 65535
    %v158 = vshrl.u32 %v127, 16
    %v159 = vmul.u32 %v155, %v157
    %v160 = vmul.u32 %v155, %v158
    %v161 = vmul.u32 %v156, %v157
    %v162 = vmul.u32 %v156, %v158
    %v163 = vshll.u32 %v160, 16
    %v164 = vshrl.u32 %v160, 16
    %v165 = vshll.u32 %v161, 16
    %v166 = vshrl.u32 %v161, 16
    %vm167 = vc.u32 %v159, %v163
    %v168 = vsel %vm167, 1, 0
    %v169 = vadd.s32 %v159, %v163
    %v170 = vadd.s32 %v162, %v168
    %vm171 = vc.u32 %v169, %v165
    %v172 = vsel %vm171, 1, 0
    %v173 = vadd.s32 %v169, %v165
    %v174 = vadd.s32 %v170, %v172
    %v175 = vadd.s32 %v174, %v164
    %v176 = vadd.s32 %v175, %v166
    %v177 = vmul.u32 %v132, %v123
    %v178 = vadd.s32 %v154, %v173
    %vm179 = vc.u32 %v154, %v173
    %v180 = vadd.s32 %v176, 1
    %v181 = vsel %vm179, %v180, %v176
    %v182 = vadd.s32 %v177, %v181
    %v183 = vadd.s32 %v182, 536870912
    %v184 = vshrl.u32 %v183, 30
    %v185 = vshll.u32 %v184, 30
    %v186 = vsub.s32 %v182, %v185
    %vm187 = vcmp.lt.s32.totalorder %v186, 0
    %v188 = vsub.s32 0, %v186
    %v189 = vsel %vm187, %v188, %v186
    %v190 = vclz %v189
    %v191 = vsub.s32 %v190, 2
    %vm192 = vcmp.gt.s32.totalorder 0, %v191
    %v193 = vsel %vm192, 0, %v191
    %v194 = vsub.s32 32, %v193
    %v195 = vshll.u32 %v186, %v193
    %v196 = vshrl.u32 %v178, %v194
    %v197 = vor.u32 %v195, %v196
    %v198 = vsub.s32 4294967266, %v193
    %v199 = vadd.s32 %v198, 127
    %v200 = vshll.u32 %v199, 23
    %v201 = vor.u32 4788187, %v200
    %v202 = vand.u32 2147483647, %v201
    %v204 = vcvt.s32.f32 %v197
    %v205 = vmul.f32 %v204, %v202
    %v206 = vxor.u32 %v205, 2147483648
    %v207 = vsel %vm86, %v206, %v205
    %v208 = vsub.s32 4, %v184
    %v209 = vsel %vm86, %v208, %v184
    %v210 = vsel %vm85, %v78, %v207
    %v211 = vsel %vm85, 0, %v209
    %v212 = vmul.f32 %v210, %v210
    %v213 = vmul.f32 %v212, -0.001358992
    %v214 = vadd.f32 %v213, 0.041655596
    %v215 = vmul.f32 %v212, %v214
    %v216 = vadd.f32 %v215, -0.4999988
    %v217 = vmul.f32 %v212, %v216
    %v218 = vadd.f32 1.0, %v217
    %v219 = vmul.f32 %v210, %v210
    %v220 = vmul.f32 %v219, -0.00019511016
    %v221 = vadd.f32 %v220, 0.008332121
    %v222 = vmul.f32 %v219, %v221
    %v223 = vadd.f32 %v222, -0.16666654
    %v224 = vmul.f32 %v219, %v223
    %v225 = vadd.f32 %v224, 1.0
    %v226 = vmul.f32 %v225, %v210
    %vm227 = vweird.f32 %v78
    %v228 = vadd.s32 %v211, 3
    %v229 = vand.u32 %v228, 3
    %vm230 = vcmp.lt.s32.totalorder %v229, 2
    %vm231 = vcmp.eq.s32.totalorder %v229, 0
    %v232 = vxor.u32 %v226, 2147483648
    %v233 = vsel %vm231, %v218, %v232
    %vm234 = vcmp.eq.s32.totalorder %v229, 2
    %v235 = vxor.u32 %v218, 2147483648
    %v236 = vsel %vm234, %v235, %v226
    %v237 = vsel %vm230, %v233, %v236
    %v238 = vsel %vm227, nan, %v237
    %v239 = vsel %vm83, %v78, %v238
    %240 = vst [vmem:[#allocation7] sm:$0xff] %v239
    // Predicated region
    $region22: #{tpu_custom_call.1} parent=1 // pred_check
      _
    $region23: #{tpu_custom_call.1} parent=1 // pred_check_branch
      %242 = sbr.rel (0) target = $region25
    $region24: #{tpu_custom_call.1} parent=1 // pred_region
      %244 = vsyncadd [#allocation4], 0
      %s246 = sshll.u32 [#allocation7], 4
      %s247 = int_to_ptr.vmem [resolvable:$true] %s246
      %s248 = sshll.u32 %s3, 4
      %s249 = int_to_ptr.hbm [resolvable:$true] %s248
      %251 = dma.vmem_to_hbm [thread:$0]  %s247, 128, %s249, [#allocation4]
    $region25: #{tpu_custom_call.1} parent=1 // pred_fallthru
      _
    // Predicated region
    $region26: #{tpu_custom_call.1} parent=1 // pred_check
      _
    $region27: #{tpu_custom_call.1} parent=1 // pred_check_branch
      %253 = sbr.rel (0) target = $region29
    $region28: #{tpu_custom_call.1} parent=1 // pred_region
      %255 = dma.done [#allocation4], 128
    $region29: #{tpu_custom_call.1} parent=1 // pred_fallthru
      _
    %256 = vsyncpa [#allocation3], 1
    %257 = vsyncpa [#allocation6], 1
    %258 = vsyncpa [#allocation4], 1

</llo_original>
